<compile_context>
chip_gen: v7x
topology: tpu7x:2x2x1
jax: 0.10.0
libtpu: 0.0.40
codegen_flags: <defaults>
</compile_context>

<pallas_src>
import math

import jax
import jax.numpy as jnp
from jax import lax
from jax.experimental import pallas as pl
from jax.experimental.pallas import tpu as pltpu

MAX_PAD = 8            # largest conv padding (conv16)
KW = 2 * MAX_PAD       # 16: fused tap-window width covering all three convs
LANES = 128
_F32 = 4


def _cdiv(a, b):
    return -(-a // b)


def _round_up(a, b):
    return _cdiv(a, b) * b


def _num_tensorcores():
    """Best-effort TensorCore count (v7x has 2 per chip); defaults to 1 (v5e/v6e)."""
    try:
        info = pltpu.get_tpu_info()
        for attr in ("num_cores", "core_count", "tensorcore_count", "num_tensorcores",
                     "cores_per_chip"):
            v = getattr(info, attr, None)
            if isinstance(v, int) and v > 0:
                return v
    except Exception:
        pass
    return 1


def _vmem_budget_bytes():
    """Per-step VMEM budget with headroom for double-buffering / compiler scratch."""
    try:
        cap = getattr(pltpu.get_tpu_info(), "vmem_capacity_bytes", None)
        if cap:
            return int(cap) * 3 // 8      # ~24 MiB on v7x (64 MiB), ~48 MiB on v5e/v6e (128 MiB)
    except Exception:
        pass
    return 24 * 1024 * 1024               # conservative: fits v7x's 64 MiB physical VMEM


def _step_vmem_bytes(B_blk, C_in, C3, L, P, Lseg, Lpool):
    cols_ext = B_blk * Lseg + P - 1
    wflat = cols_ext + KW - 1
    m_out = B_blk * Lpool
    resident = 2 * (C3 * KW * C_in + C3 + Lseg * Lpool) * _F32      # W, bias, selector
    dbuf_io = (2 * B_blk * C_in * L + 2 * C3 * m_out) * _F32        # double-buffered in/out blocks
    scratch = (C_in * wflat + KW * C_in * cols_ext) * _F32          # xflat + im2col slabs
    live = 3 * C3 * cols_ext * _F32                                 # cat + max-tree temporaries
    return resident + dbuf_io + scratch + live


def _pick_b_blk(N, C_in, C3, L, P, Lseg, Lpool, n_cores, vmem_budget):
    # ~1024 matmul columns per grid step (tile sweep: 256-wide ~63% of HBM roofline, 1024 ~86%).
    B_blk = max(1, min(_cdiv(1024, Lseg), N))
    # Explicit VMEM cap (matters on v7x's 64 MiB / v5e's small default scope).
    while B_blk > 1 and _step_vmem_bytes(B_blk, C_in, C3, L, P, Lseg, Lpool) > vmem_budget:
        B_blk -= 1
    # Lane-dense output store: prefer M_OUT = B_blk*Lpool to be a multiple of 128 (round DOWN so
    # the VMEM / N caps still hold).
    align = LANES // math.gcd(Lpool, LANES)
    if B_blk >= align:
        B_blk = (B_blk // align) * align
    # Keep every TensorCore busy and balanced (v7x): make the grid a multiple of n_cores.
    if n_cores > 1 and N >= n_cores:
        g = n_cores * max(1, _cdiv(_cdiv(N, n_cores), B_blk))
        B_blk = _cdiv(N, g)
    return max(1, B_blk)


def make_convlayer_kernel(C_in, C_out, L, P, B_blk, Lseg):
    L1 = L + 1                     # conv output length (same for K=4/p=2, K=8/p=4, K=16/p=8)
    Lpool = (L1 - P) // P + 1      # MaxPool1d(P, stride=P), floor mode
    C3 = 3 * C_out
    COLS = B_blk * Lseg            # columns kept by the window max
    COLS_EXT = COLS + (P - 1)      # conv matmul width (shifted window-max slices stay in-bounds)
    WFLAT = COLS_EXT + KW - 1      # flat padded-input width (room for the largest tap shift)
    M_OUT = B_blk * Lpool          # pooled columns emitted per grid step

    def kernel(x_ref, w_ref, b_ref, s_ref, o_ref, xflat_ref, col_ref):
        # 1) Zero ONLY the pad-gap / alignment / tail columns (the data region is fully
        #    overwritten by the scatter below), every grid step.  Do NOT gate on program_id==0:
        #    under dimension_semantics=("parallel",) each core has its own private scratch.
        xflat_ref[:, 0:MAX_PAD] = jnp.zeros((C_in, MAX_PAD), jnp.float32)
        for b in range(B_blk):
            start = b * Lseg + MAX_PAD + L
            stop = (b + 1) * Lseg + MAX_PAD if b + 1 < B_blk else WFLAT
            xflat_ref[:, start:stop] = jnp.zeros((C_in, stop - start), jnp.float32)
        # Scatter each batch's (C_in, L) rows into its 128-lane-aligned segment (padding lives
        # in VMEM; the input DMA only moves real data).
        for b in range(B_blk):
            base = b * Lseg + MAX_PAD
            xflat_ref[:, base:base + L] = x_ref[b]

        # 2) im2col: KW lane-shifted copies stacked along rows -> (KW*C_in, COLS_EXT).
        for s in range(KW):
            col_ref[s * C_in:(s + 1) * C_in, :] = xflat_ref[:, s:s + COLS_EXT]

        # 3) ONE fused MXU matmul for all three convs; the channel concat is free because rows
        #    are already ordered conv4 | conv8 | conv16.  Bias is added after pooling (commutes
        #    with the window max and 0/1 selection), saving a (C3, COLS_EXT) VPU add.
        cat = jnp.dot(w_ref[...], col_ref[...], preferred_element_type=jnp.float32)

        # 4) MaxPool window max via a shift-doubling tree: ceil(log2 P) max passes, not P-1.
        m = cat
        width = COLS_EXT
        covered = 1
        while covered * 2 <= P:
            width -= covered
            m = jnp.maximum(m[:, :width], m[:, covered:covered + width])
            covered *= 2
        if covered < P:
            sh = P - covered
            width -= sh
            m = jnp.maximum(m[:, :width], m[:, sh:sh + width])
        # width == COLS here.

        # 5) Shared per-batch 0/1 selector (Lseg, Lpool) compacts the window-start columns.
        #    Selection MACs/VMEM are linear in B_blk (old block-diagonal selector was quadratic)
        #    and garbage / inter-batch columns never reach the output.
        sel = s_ref[...]
        pooled = [
            jnp.dot(m[:, b * Lseg:b * Lseg + Lseg], sel, preferred_element_type=jnp.float32)
            for b in range(B_blk)
        ]
        out = pooled[0] if B_blk == 1 else jnp.concatenate(pooled, axis=1)
        o_ref[0] = out + b_ref[...]          # one lane-dense (C3, M_OUT) store

    dims = dict(L1=L1, Lpool=Lpool, C3=C3, COLS=COLS, COLS_EXT=COLS_EXT,
                WFLAT=WFLAT, M_OUT=M_OUT)
    return kernel, dims


def conv_layer_forward(x, w4, b4, w8, b8, w16, b16, max_pool_size):
    """x: (N, C_in, L).  Weights w* in PyTorch OIW layout (C_out, C_in, K); biases b*: (C_out,)."""
    x = x.astype(jnp.float32)
    N, C_in, L = x.shape
    C_out = w4.shape[0]
    P = int(max_pool_size)

    L1 = L + 1
    Lpool = (L1 - P) // P + 1
    C3 = 3 * C_out
    # Lane-aligned per-batch segment: scatter stores and per-batch selector slices stay on
    # 128-lane boundaries (cost: extra zero columns the selector never picks).
    Lseg = _round_up(L + 2 * MAX_PAD, LANES)

    n_cores = _num_tensorcores()
    vmem_budget = _vmem_budget_bytes()
    B_blk = _pick_b_blk(N, C_in, C3, L, P, Lseg, Lpool, n_cores, vmem_budget)

    G = _cdiv(N, B_blk)
    N_pad = G * B_blk
    if N_pad != N:
        x = jnp.pad(x, ((0, N_pad - N), (0, 0), (0, 0)))

    kernel, d = make_convlayer_kernel(C_in, C_out, L, P, B_blk, Lseg)
    COLS_EXT, WFLAT, M_OUT = d["COLS_EXT"], d["WFLAT"], d["M_OUT"]

    # Fused weight matrix (C3, KW*C_in): tap k of a conv with padding p sits at shift
    # s = (MAX_PAD - p) + k inside the KW-wide window of the MAX_PAD-padded input.
    # TODO(synk): for production channel counts (MXU-bound), split back into 3 matmuls over
    # overlapping col_ref windows to skip the structurally-zero conv4/conv8 tap blocks.
    W = jnp.zeros((C3, KW * C_in), jnp.float32)
    for row0, (w, pad) in zip((0, C_out, 2 * C_out), ((w4, 2), (w8, 4), (w16, 8))):
        K = w.shape[-1]
        start = MAX_PAD - pad
        for k in range(K):
            W = W.at[row0:row0 + C_out,
                     (start + k) * C_in:(start + k + 1) * C_in].set(
                         w[:, :, k].astype(jnp.float32))
    bias = jnp.concatenate([b4, b8, b16]).astype(jnp.float32)[:, None]           # (C3, 1)

    # Shared per-batch 0/1 selector: pooled column j picks window-start column j*P of a segment.
    S = (jnp.arange(Lseg)[:, None] == (jnp.arange(Lpool) * P)[None, :]).astype(jnp.float32)

    vmem_limit = int(min(vmem_budget * 2, 1 << 30))

    out_flat = pl.pallas_call(
        kernel,
        out_shape=jax.ShapeDtypeStruct((G, C3, M_OUT), jnp.float32),
        grid=(G,),
        in_specs=[
            pl.BlockSpec((B_blk, C_in, L), lambda n: (n, 0, 0)),     # unpadded input block
            pl.BlockSpec((C3, KW * C_in), lambda n: (0, 0)),         # fused conv weights (resident)
            pl.BlockSpec((C3, 1), lambda n: (0, 0)),                 # fused bias
            pl.BlockSpec((Lseg, Lpool), lambda n: (0, 0)),           # shared pooling selector
        ],
        out_specs=pl.BlockSpec((1, C3, M_OUT), lambda n: (n, 0, 0)),
        scratch_shapes=[
            pltpu.VMEM((C_in, WFLAT), jnp.float32),                  # zero-padded flat input slab
            pltpu.VMEM((KW * C_in, COLS_EXT), jnp.float32),          # im2col slab
        ],
        compiler_params=pltpu.CompilerParams(
            dimension_semantics=("parallel",),
            vmem_limit_bytes=vmem_limit,
        ),
    )(x, W, bias, S)

    # Wrapper-side layout plumbing only: (G, C3, B_blk*Lpool) -> (N, 3*C_out, Lpool).
    out = out_flat.reshape(G, C3, B_blk, Lpool).transpose(0, 2, 1, 3)
    return out.reshape(N_pad, C3, Lpool)[:N]


def init_conv_params(key, C_in, C_out, K):
    """PyTorch-style uniform(-1/sqrt(fan_in), +1/sqrt(fan_in)) init, deterministic."""
    kw_, kb_ = jax.random.split(key)
    bound = 1.0 / (C_in * K) ** 0.5
    w = jax.random.uniform(kw_, (C_out, C_in, K), jnp.float32, -bound, bound)
    b = jax.random.uniform(kb_, (C_out,), jnp.float32, -bound, bound)
    return w, b


def reference_forward(x, params_oik, max_pool_size):
    """Pure-JAX reference matching the torch module (for verification)."""
    outs = []
    for (w, b), pad in zip(params_oik, (2, 4, 8)):
        y = lax.conv_general_dilated(
            x, w, window_strides=(1,), padding=[(pad, pad)],
            dimension_numbers=("NCH", "OIH", "NCH"))
        outs.append(y + b[None, :, None])
    cat = jnp.concatenate(outs, axis=1)
    P = max_pool_size
    L1 = cat.shape[-1]
    Lpool = (L1 - P) // P + 1
    return cat[:, :, :Lpool * P].reshape(cat.shape[0], cat.shape[1], Lpool, P).max(axis=-1)


if __name__ == "__main__":
    # Small shapes consistent with the module: batch=2, in_channels=4, out_channels=4,
    # sequence length=16, max_pool_size=2.
    N, C_in, C_out, L, P = 2, 4, 4, 16, 2

    key = jax.random.PRNGKey(0)
    kx, k4, k8, k16 = jax.random.split(key, 4)
    x = jax.random.normal(kx, (N, C_in, L), jnp.float32)

    w4, b4 = init_conv_params(k4, C_in, C_out, 4)
    w8, b8 = init_conv_params(k8, C_in, C_out, 8)
    w16, b16 = init_conv_params(k16, C_in, C_out, 16)

    out = conv_layer_forward(x, w4, b4, w8, b8, w16, b16, P)
    out = jax.block_until_ready(out)

    ref = reference_forward(x, [(w4, b4), (w8, b8), (w16, b16)], P)
    assert out.shape == ref.shape, (out.shape, ref.shape)
    assert jnp.allclose(out, ref, atol=1e-4, rtol=1e-4), "mismatch vs JAX reference"

    print("KERNEL_OK")
</pallas_src>

<mosaic_0001>
module attributes {stable_mosaic.version = 11 : i64} {
  func.func @kernel(%arg0: i32, %arg1: memref<2x4x16xf32, #tpu.memory_space<vmem>>, %arg2: memref<12x64xf32, #tpu.memory_space<vmem>>, %arg3: memref<12x1xf32, #tpu.memory_space<vmem>>, %arg4: memref<128x8xf32, #tpu.memory_space<vmem>>, %arg5: memref<1x12x16xf32, #tpu.memory_space<vmem>>, %arg6: memref<4x272xf32, #tpu.memory_space<vmem>>, %arg7: memref<64x257xf32, #tpu.memory_space<vmem>>) attributes {dimension_semantics = [#tpu.dimension_semantics<parallel>], iteration_bounds = array<i64: 1>, scalar_prefetch = 0 : i64, scratch_operands = 2 : i64, tpu.core_type = #tpu.core_type<tc>, window_params = [{transform_indices = @transform_0, window_bounds = array<i64: 2, 4, 16>}, {pipeline_mode = #tpu.pipeline_mode<synchronous>, transform_indices = @transform_1, window_bounds = array<i64: 12, 64>}, {pipeline_mode = #tpu.pipeline_mode<synchronous>, transform_indices = @transform_2, window_bounds = array<i64: 12, 1>}, {pipeline_mode = #tpu.pipeline_mode<synchronous>, transform_indices = @transform_3, window_bounds = array<i64: 128, 8>}, {transform_indices = @transform_4, window_bounds = array<i64: 1, 12, 16>}]} {
    %cst = arith.constant 0.000000e+00 : f32
    %0 = vector.broadcast %cst : f32 to vector<4x8xf32>
    %c0 = arith.constant 0 : index
    %c0_0 = arith.constant 0 : index
    %1 = vector.load %arg6[%c0, %c0_0] : memref<4x272xf32, #tpu.memory_space<vmem>>, vector<4x8xf32>
    tpu.vector_store %arg6[%c0, %c0_0], %0 {strides = array<i32>} : memref<4x272xf32, #tpu.memory_space<vmem>>, vector<4x8xf32>,
    %cst_1 = arith.constant 0.000000e+00 : f32
    %2 = vector.broadcast %cst_1 : f32 to vector<4x112xf32>
    %c0_2 = arith.constant 0 : index
    %c24 = arith.constant 24 : index
    %3 = vector.load %arg6[%c0_2, %c24] : memref<4x272xf32, #tpu.memory_space<vmem>>, vector<4x112xf32>
    tpu.vector_store %arg6[%c0_2, %c24], %2 {strides = array<i32>} : memref<4x272xf32, #tpu.memory_space<vmem>>, vector<4x112xf32>,
    %cst_3 = arith.constant 0.000000e+00 : f32
    %4 = vector.broadcast %cst_3 : f32 to vector<4x120xf32>
    %c0_4 = arith.constant 0 : index
    %c152 = arith.constant 152 : index
    %5 = vector.load %arg6[%c0_4, %c152] : memref<4x272xf32, #tpu.memory_space<vmem>>, vector<4x120xf32>
    tpu.vector_store %arg6[%c0_4, %c152], %4 {strides = array<i32>} : memref<4x272xf32, #tpu.memory_space<vmem>>, vector<4x120xf32>,
    %c0_5 = arith.constant 0 : index
    %c0_6 = arith.constant 0 : index
    %c0_7 = arith.constant 0 : index
    %6 = vector.load %arg1[%c0_5, %c0_6, %c0_7] : memref<2x4x16xf32, #tpu.memory_space<vmem>>, vector<1x4x16xf32>
    %7 = vector.shape_cast %6 : vector<1x4x16xf32> to vector<4x16xf32>
    %c0_8 = arith.constant 0 : index
    %c8 = arith.constant 8 : index
    %8 = vector.load %arg6[%c0_8, %c8] : memref<4x272xf32, #tpu.memory_space<vmem>>, vector<4x16xf32>
    tpu.vector_store %arg6[%c0_8, %c8], %7 {strides = array<i32>} : memref<4x272xf32, #tpu.memory_space<vmem>>, vector<4x16xf32>,
    %c1 = arith.constant 1 : index
    %c0_9 = arith.constant 0 : index
    %c0_10 = arith.constant 0 : index
    %9 = vector.load %arg1[%c1, %c0_9, %c0_10] : memref<2x4x16xf32, #tpu.memory_space<vmem>>, vector<1x4x16xf32>
    %10 = vector.shape_cast %9 : vector<1x4x16xf32> to vector<4x16xf32>
    %c0_11 = arith.constant 0 : index
    %c136 = arith.constant 136 : index
    %11 = vector.load %arg6[%c0_11, %c136] : memref<4x272xf32, #tpu.memory_space<vmem>>, vector<4x16xf32>
    tpu.vector_store %arg6[%c0_11, %c136], %10 {strides = array<i32>} : memref<4x272xf32, #tpu.memory_space<vmem>>, vector<4x16xf32>,
    %c0_12 = arith.constant 0 : index
    %c0_13 = arith.constant 0 : index
    %12 = vector.load %arg6[%c0_12, %c0_13] : memref<4x272xf32, #tpu.memory_space<vmem>>, vector<4x257xf32>
    %c0_14 = arith.constant 0 : index
    %c0_15 = arith.constant 0 : index
    %13 = vector.load %arg7[%c0_14, %c0_15] : memref<64x257xf32, #tpu.memory_space<vmem>>, vector<4x257xf32>
    tpu.vector_store %arg7[%c0_14, %c0_15], %12 {strides = array<i32>} : memref<64x257xf32, #tpu.memory_space<vmem>>, vector<4x257xf32>,
    %c0_16 = arith.constant 0 : index
    %c1_17 = arith.constant 1 : index
    %14 = vector.load %arg6[%c0_16, %c1_17] : memref<4x272xf32, #tpu.memory_space<vmem>>, vector<4x257xf32>
    %c4 = arith.constant 4 : index
    %c0_18 = arith.constant 0 : index
    %15 = vector.load %arg7[%c4, %c0_18] : memref<64x257xf32, #tpu.memory_space<vmem>>, vector<4x257xf32>
    tpu.vector_store %arg7[%c4, %c0_18], %14 {strides = array<i32>} : memref<64x257xf32, #tpu.memory_space<vmem>>, vector<4x257xf32>,
    %c0_19 = arith.constant 0 : index
    %c2 = arith.constant 2 : index
    %16 = vector.load %arg6[%c0_19, %c2] : memref<4x272xf32, #tpu.memory_space<vmem>>, vector<4x257xf32>
    %c8_20 = arith.constant 8 : index
    %c0_21 = arith.constant 0 : index
    %17 = vector.load %arg7[%c8_20, %c0_21] : memref<64x257xf32, #tpu.memory_space<vmem>>, vector<4x257xf32>
    tpu.vector_store %arg7[%c8_20, %c0_21], %16 {strides = array<i32>} : memref<64x257xf32, #tpu.memory_space<vmem>>, vector<4x257xf32>,
    %c0_22 = arith.constant 0 : index
    %c3 = arith.constant 3 : index
    %18 = vector.load %arg6[%c0_22, %c3] : memref<4x272xf32, #tpu.memory_space<vmem>>, vector<4x257xf32>
    %c12 = arith.constant 12 : index
    %c0_23 = arith.constant 0 : index
    %19 = vector.load %arg7[%c12, %c0_23] : memref<64x257xf32, #tpu.memory_space<vmem>>, vector<4x257xf32>
    tpu.vector_store %arg7[%c12, %c0_23], %18 {strides = array<i32>} : memref<64x257xf32, #tpu.memory_space<vmem>>, vector<4x257xf32>,
    %c0_24 = arith.constant 0 : index
    %c4_25 = arith.constant 4 : index
    %20 = vector.load %arg6[%c0_24, %c4_25] : memref<4x272xf32, #tpu.memory_space<vmem>>, vector<4x257xf32>
    %c16 = arith.constant 16 : index
    %c0_26 = arith.constant 0 : index
    %21 = vector.load %arg7[%c16, %c0_26] : memref<64x257xf32, #tpu.memory_space<vmem>>, vector<4x257xf32>
    tpu.vector_store %arg7[%c16, %c0_26], %20 {strides = array<i32>} : memref<64x257xf32, #tpu.memory_space<vmem>>, vector<4x257xf32>,
    %c0_27 = arith.constant 0 : index
    %c5 = arith.constant 5 : index
    %22 = vector.load %arg6[%c0_27, %c5] : memref<4x272xf32, #tpu.memory_space<vmem>>, vector<4x257xf32>
    %c20 = arith.constant 20 : index
    %c0_28 = arith.constant 0 : index
    %23 = vector.load %arg7[%c20, %c0_28] : memref<64x257xf32, #tpu.memory_space<vmem>>, vector<4x257xf32>
    tpu.vector_store %arg7[%c20, %c0_28], %22 {strides = array<i32>} : memref<64x257xf32, #tpu.memory_space<vmem>>, vector<4x257xf32>,
    %c0_29 = arith.constant 0 : index
    %c6 = arith.constant 6 : index
    %24 = vector.load %arg6[%c0_29, %c6] : memref<4x272xf32, #tpu.memory_space<vmem>>, vector<4x257xf32>
    %c24_30 = arith.constant 24 : index
    %c0_31 = arith.constant 0 : index
    %25 = vector.load %arg7[%c24_30, %c0_31] : memref<64x257xf32, #tpu.memory_space<vmem>>, vector<4x257xf32>
    tpu.vector_store %arg7[%c24_30, %c0_31], %24 {strides = array<i32>} : memref<64x257xf32, #tpu.memory_space<vmem>>, vector<4x257xf32>,
    %c0_32 = arith.constant 0 : index
    %c7 = arith.constant 7 : index
    %26 = vector.load %arg6[%c0_32, %c7] : memref<4x272xf32, #tpu.memory_space<vmem>>, vector<4x257xf32>
    %c28 = arith.constant 28 : index
    %c0_33 = arith.constant 0 : index
    %27 = vector.load %arg7[%c28, %c0_33] : memref<64x257xf32, #tpu.memory_space<vmem>>, vector<4x257xf32>
    tpu.vector_store %arg7[%c28, %c0_33], %26 {strides = array<i32>} : memref<64x257xf32, #tpu.memory_space<vmem>>, vector<4x257xf32>,
    %c0_34 = arith.constant 0 : index
    %c8_35 = arith.constant 8 : index
    %28 = vector.load %arg6[%c0_34, %c8_35] : memref<4x272xf32, #tpu.memory_space<vmem>>, vector<4x257xf32>
    %c32 = arith.constant 32 : index
    %c0_36 = arith.constant 0 : index
    %29 = vector.load %arg7[%c32, %c0_36] : memref<64x257xf32, #tpu.memory_space<vmem>>, vector<4x257xf32>
    tpu.vector_store %arg7[%c32, %c0_36], %28 {strides = array<i32>} : memref<64x257xf32, #tpu.memory_space<vmem>>, vector<4x257xf32>,
    %c0_37 = arith.constant 0 : index
    %c9 = arith.constant 9 : index
    %30 = vector.load %arg6[%c0_37, %c9] : memref<4x272xf32, #tpu.memory_space<vmem>>, vector<4x257xf32>
    %c36 = arith.constant 36 : index
    %c0_38 = arith.constant 0 : index
    %31 = vector.load %arg7[%c36, %c0_38] : memref<64x257xf32, #tpu.memory_space<vmem>>, vector<4x257xf32>
    tpu.vector_store %arg7[%c36, %c0_38], %30 {strides = array<i32>} : memref<64x257xf32, #tpu.memory_space<vmem>>, vector<4x257xf32>,
    %c0_39 = arith.constant 0 : index
    %c10 = arith.constant 10 : index
    %32 = vector.load %arg6[%c0_39, %c10] : memref<4x272xf32, #tpu.memory_space<vmem>>, vector<4x257xf32>
    %c40 = arith.constant 40 : index
    %c0_40 = arith.constant 0 : index
    %33 = vector.load %arg7[%c40, %c0_40] : memref<64x257xf32, #tpu.memory_space<vmem>>, vector<4x257xf32>
    tpu.vector_store %arg7[%c40, %c0_40], %32 {strides = array<i32>} : memref<64x257xf32, #tpu.memory_space<vmem>>, vector<4x257xf32>,
    %c0_41 = arith.constant 0 : index
    %c11 = arith.constant 11 : index
    %34 = vector.load %arg6[%c0_41, %c11] : memref<4x272xf32, #tpu.memory_space<vmem>>, vector<4x257xf32>
    %c44 = arith.constant 44 : index
    %c0_42 = arith.constant 0 : index
    %35 = vector.load %arg7[%c44, %c0_42] : memref<64x257xf32, #tpu.memory_space<vmem>>, vector<4x257xf32>
    tpu.vector_store %arg7[%c44, %c0_42], %34 {strides = array<i32>} : memref<64x257xf32, #tpu.memory_space<vmem>>, vector<4x257xf32>,
    %c0_43 = arith.constant 0 : index
    %c12_44 = arith.constant 12 : index
    %36 = vector.load %arg6[%c0_43, %c12_44] : memref<4x272xf32, #tpu.memory_space<vmem>>, vector<4x257xf32>
    %c48 = arith.constant 48 : index
    %c0_45 = arith.constant 0 : index
    %37 = vector.load %arg7[%c48, %c0_45] : memref<64x257xf32, #tpu.memory_space<vmem>>, vector<4x257xf32>
    tpu.vector_store %arg7[%c48, %c0_45], %36 {strides = array<i32>} : memref<64x257xf32, #tpu.memory_space<vmem>>, vector<4x257xf32>,
    %c0_46 = arith.constant 0 : index
    %c13 = arith.constant 13 : index
    %38 = vector.load %arg6[%c0_46, %c13] : memref<4x272xf32, #tpu.memory_space<vmem>>, vector<4x257xf32>
    %c52 = arith.constant 52 : index
    %c0_47 = arith.constant 0 : index
    %39 = vector.load %arg7[%c52, %c0_47] : memref<64x257xf32, #tpu.memory_space<vmem>>, vector<4x257xf32>
    tpu.vector_store %arg7[%c52, %c0_47], %38 {strides = array<i32>} : memref<64x257xf32, #tpu.memory_space<vmem>>, vector<4x257xf32>,
    %c0_48 = arith.constant 0 : index
    %c14 = arith.constant 14 : index
    %40 = vector.load %arg6[%c0_48, %c14] : memref<4x272xf32, #tpu.memory_space<vmem>>, vector<4x257xf32>
    %c56 = arith.constant 56 : index
    %c0_49 = arith.constant 0 : index
    %41 = vector.load %arg7[%c56, %c0_49] : memref<64x257xf32, #tpu.memory_space<vmem>>, vector<4x257xf32>
    tpu.vector_store %arg7[%c56, %c0_49], %40 {strides = array<i32>} : memref<64x257xf32, #tpu.memory_space<vmem>>, vector<4x257xf32>,
    %c0_50 = arith.constant 0 : index
    %c15 = arith.constant 15 : index
    %42 = vector.load %arg6[%c0_50, %c15] : memref<4x272xf32, #tpu.memory_space<vmem>>, vector<4x257xf32>
    %c60 = arith.constant 60 : index
    %c0_51 = arith.constant 0 : index
    %43 = vector.load %arg7[%c60, %c0_51] : memref<64x257xf32, #tpu.memory_space<vmem>>, vector<4x257xf32>
    tpu.vector_store %arg7[%c60, %c0_51], %42 {strides = array<i32>} : memref<64x257xf32, #tpu.memory_space<vmem>>, vector<4x257xf32>,
    %c0_52 = arith.constant 0 : index
    %c0_53 = arith.constant 0 : index
    %44 = vector.load %arg2[%c0_52, %c0_53] : memref<12x64xf32, #tpu.memory_space<vmem>>, vector<12x64xf32>
    %c0_54 = arith.constant 0 : index
    %c0_55 = arith.constant 0 : index
    %45 = vector.load %arg7[%c0_54, %c0_55] : memref<64x257xf32, #tpu.memory_space<vmem>>, vector<64x257xf32>
    %cst_56 = arith.constant dense<0.000000e+00> : vector<12x257xf32>
    %46 = tpu.matmul %44, %45, %cst_56 {dimension_numbers = #tpu.dot_dimension_numbers<[1], [0], [0], [1], [0, 0, 1, 1], [], []>} : vector<12x64xf32>, vector<64x257xf32>, vector<12x257xf32> -> vector<12x257xf32>
    %47 = vector.extract_strided_slice %46 {offsets = [0, 0], sizes = [12, 256], strides = [1, 1]} : vector<12x257xf32> to vector<12x256xf32>
    %48 = vector.extract_strided_slice %46 {offsets = [0, 1], sizes = [12, 256], strides = [1, 1]} : vector<12x257xf32> to vector<12x256xf32>
    %49 = arith.maximumf %47, %48 : vector<12x256xf32>
    %c0_57 = arith.constant 0 : index
    %c0_58 = arith.constant 0 : index
    %50 = vector.load %arg4[%c0_57, %c0_58] : memref<128x8xf32, #tpu.memory_space<vmem>>, vector<128x8xf32>
    %51 = vector.extract_strided_slice %49 {offsets = [0, 0], sizes = [12, 128], strides = [1, 1]} : vector<12x256xf32> to vector<12x128xf32>
    %cst_59 = arith.constant dense<0.000000e+00> : vector<12x8xf32>
    %52 = tpu.matmul %51, %50, %cst_59 {dimension_numbers = #tpu.dot_dimension_numbers<[1], [0], [0], [1], [0, 0, 1, 1], [], []>} : vector<12x128xf32>, vector<128x8xf32>, vector<12x8xf32> -> vector<12x8xf32>
    %53 = vector.extract_strided_slice %49 {offsets = [0, 128], sizes = [12, 128], strides = [1, 1]} : vector<12x256xf32> to vector<12x128xf32>
    %cst_60 = arith.constant dense<0.000000e+00> : vector<12x8xf32>
    %54 = tpu.matmul %53, %50, %cst_60 {dimension_numbers = #tpu.dot_dimension_numbers<[1], [0], [0], [1], [0, 0, 1, 1], [], []>} : vector<12x128xf32>, vector<128x8xf32>, vector<12x8xf32> -> vector<12x8xf32>
    %55 = tpu.concatenate %52, %54 in 1 : vector<12x8xf32>, vector<12x8xf32> -> vector<12x16xf32>
    %c0_61 = arith.constant 0 : index
    %c0_62 = arith.constant 0 : index
    %56 = vector.load %arg3[%c0_61, %c0_62] : memref<12x1xf32, #tpu.memory_space<vmem>>, vector<12x1xf32>
    %57 = vector.broadcast %56 : vector<12x1xf32> to vector<12x16xf32>
    %58 = arith.addf %55, %57 : vector<12x16xf32>
    %c0_63 = arith.constant 0 : index
    %c0_64 = arith.constant 0 : index
    %c0_65 = arith.constant 0 : index
    %59 = vector.load %arg5[%c0_63, %c0_64, %c0_65] : memref<1x12x16xf32, #tpu.memory_space<vmem>>, vector<1x12x16xf32>
    %60 = vector.shape_cast %59 : vector<1x12x16xf32> to vector<12x16xf32>
    %61 = vector.shape_cast %58 : vector<12x16xf32> to vector<1x12x16xf32>
    tpu.vector_store %arg5[%c0_63, %c0_64, %c0_65], %61 {strides = array<i32>} : memref<1x12x16xf32, #tpu.memory_space<vmem>>, vector<1x12x16xf32>,
    return
  }
  func.func @transform_0(%arg0: i32) -> (i32, i32, i32) {
    %c0_i32 = arith.constant 0 : i32
    %c0_i32_0 = arith.constant 0 : i32
    %c0_i32_1 = arith.constant 0 : i32
    return %arg0, %c0_i32, %c0_i32_0 : i32, i32, i32
  }
  func.func @transform_1(%arg0: i32) -> (i32, i32) {
    %c0_i32 = arith.constant 0 : i32
    %c0_i32_0 = arith.constant 0 : i32
    %c0_i32_1 = arith.constant 0 : i32
    return %c0_i32, %c0_i32_0 : i32, i32
  }
  func.func @transform_2(%arg0: i32) -> (i32, i32) {
    %c0_i32 = arith.constant 0 : i32
    %c0_i32_0 = arith.constant 0 : i32
    %c0_i32_1 = arith.constant 0 : i32
    return %c0_i32, %c0_i32_0 : i32, i32
  }
  func.func @transform_3(%arg0: i32) -> (i32, i32) {
    %c0_i32 = arith.constant 0 : i32
    %c0_i32_0 = arith.constant 0 : i32
    %c0_i32_1 = arith.constant 0 : i32
    return %c0_i32, %c0_i32_0 : i32, i32
  }
  func.func @transform_4(%arg0: i32) -> (i32, i32, i32) {
    %c0_i32 = arith.constant 0 : i32
    %c0_i32_0 = arith.constant 0 : i32
    %c0_i32_1 = arith.constant 0 : i32
    return %arg0, %c0_i32, %c0_i32_0 : i32, i32, i32
  }
}

</mosaic_0001>

<llo_original>
// kernel: tpu_custom_call.1
$region0: #{tpu_custom_call.1}
  #allocation0 [shape = 'u32[]', space=smem, size = 0x4, offset = 0x4, fixed_abs, tag = 'smem constant byte address 0x4 - core index']
  #allocation1 [shape = 'u32[144,128]{1,0:T(1,128)}', space=vmem, size = 0x12000, scoped, tag = 'internal scratch']
  #allocation2 [shape = 'f32[4,272]{1,0:T(4,128)}', space=vmem, size = 0x1800, scoped, tag = 'scratch operand']
  #allocation3 [shape = 'f32[64,257]{1,0:T(8,128)}', space=vmem, size = 0x18000, scoped, tag = 'scratch operand']
  %s0 = inlined_call_operand.vmem [shape: f32[2,4,16], index: 0, kind: input, shape index: {}]
  %s1 = inlined_call_operand.vmem [shape: f32[12,64], index: 1, kind: input, shape index: {}]
  %s2 = inlined_call_operand.vmem [shape: f32[12,1], index: 2, kind: input, shape index: {}]
  %s3 = inlined_call_operand.vmem [shape: f32[128,8], index: 3, kind: input, shape index: {}]
  %s4 = inlined_call_operand.vmem [shape: f32[1,12,16], index: 4, kind: output, shape index: {}]
  %s5 = sld [smem:[#allocation0]]
  $region26: #{tpu_custom_call.1} parent=0
    _
  %s7 = ssub.s32 1, %s5
  %s8 = scalar_select 0, %s7, %s5
  // Predicated region
  $region2: #{tpu_custom_call.1} parent=0 // pred_check
    _
  $region3: #{tpu_custom_call.1} parent=0 // pred_check_branch
    %10 = sbr.rel (0) target = $region5
  $region4: #{tpu_custom_call.1} parent=0 // pred_region
    _
  $region5: #{tpu_custom_call.1} parent=0 // pred_fallthru
    _
  // Predicated region
  $region6: #{tpu_custom_call.1} parent=0 // pred_check
    _
  $region7: #{tpu_custom_call.1} parent=0 // pred_check_branch
    %12 = sbr.rel (0) target = $region9
  $region8: #{tpu_custom_call.1} parent=0 // pred_region
    _
  $region9: #{tpu_custom_call.1} parent=0 // pred_fallthru
    _
  // Predicated region
  $region10: #{tpu_custom_call.1} parent=0 // pred_check
    _
  $region11: #{tpu_custom_call.1} parent=0 // pred_check_branch
    %14 = sbr.rel (0) target = $region13
  $region12: #{tpu_custom_call.1} parent=0 // pred_region
    _
  $region13: #{tpu_custom_call.1} parent=0 // pred_fallthru
    _
  // Predicated region
  $region14: #{tpu_custom_call.1} parent=0 // pred_check
    _
  $region15: #{tpu_custom_call.1} parent=0 // pred_check_branch
    %16 = sbr.rel (0) target = $region17
  $region16: #{tpu_custom_call.1} parent=0 // pred_region
    _
  $region17: #{tpu_custom_call.1} parent=0 // pred_fallthru
    _
  %vm17 = vcmask 60416
  %18 = vst.msk [vmem:[#allocation2] sm:$0xf] %vm17, 0.0
  %vm19 = vcmask 1043648
  %vm20 = vcmask 64516
  %vm21 = vmor %vm20, %vm19
  %22 = vst.msk [vmem:[#allocation2] sm:$0xff] %vm21, 0.0
  %vm23 = vcmask 130052
  %vm24 = vmor %vm23, %vm19
  %25 = vst.msk [vmem:[#allocation2 + $0x4] sm:$0xff] %vm24, 0.0
  %v26 = vld [vmem:[%s0] sm:$0xf]
  %28 = vrot.lane.b32.xlu0 %v26, 8
  %v29 = vpop.permute.xlu0 %28
  %vm31 = vcmask 191552
  %32 = vst.msk [vmem:[#allocation2] sm:$0xf] %vm31, %v29
  %s33 = scalar_lea.vmem %s0, 4
  %v34 = vld [vmem:[%s33] sm:$0xf]
  %36 = vrot.lane.b32.xlu0 %v34, 8
  %v37 = vpop.permute.xlu0 %36
  %39 = vst.msk [vmem:[#allocation2 + $0x4] sm:$0xf] %vm31, %v37
  %v40 = vld [vmem:[#allocation2] sm:$0xff]
  %v41 = vld [vmem:[#allocation2 + $0x8] sm:$0xf]
  %v43 = vcombine.high %v40, %v40
  %45 = vst [vmem:[#allocation3] sm:$0xf] %v40
  %46 = vst [vmem:[#allocation3 + $0x8] sm:$0xf] %v43
  %vm47 = vcmask 3072
  %48 = vst.msk [vmem:[#allocation3 + $0x10] sm:$0xf] %vm47, %v41
  %v49 = vld [vmem:[#allocation2] sm:$0xff]
  %v50 = vld [vmem:[#allocation2 + $0x8] sm:$0xf]
  %v53 = vcombine.low %v49, %v49
  %v54 = vcombine.low %v50, %v50
  %55 = vrot.lane.b32.xlu0 %v53, 127
  %v56 = vpop.permute.xlu0 %55
  %57 = vrot.lane.b32.xlu0 %v49, 127
  %v58 = vpop.permute.xlu0 %57
  %59 = vrot.lane.b32.xlu0 %v54, 127
  %v60 = vpop.permute.xlu0 %59
  %vm61 = vcmask 1039360
  %v62 = vsel %vm61, %v56, %v58
  %v63 = vsel %vm61, %v58, %v60
  %67 = vst [vmem:[#allocation3] sm:$0xf0] %v62
  %68 = vst [vmem:[#allocation3 + $0x8] sm:$0xf0] %v63
  %vm69 = vcmask 7172
  %70 = vst.msk [vmem:[#allocation3 + $0x10] sm:$0xf0] %vm69, %v60
  %v71 = vld [vmem:[#allocation2] sm:$0xff]
  %v72 = vld [vmem:[#allocation2 + $0x8] sm:$0xf]
  %v75 = vcombine.high %v71, %v71
  %76 = vrot.lane.b32.xlu0 %v71, 126
  %v77 = vpop.permute.xlu0 %76
  %78 = vrot.lane.b32.xlu0 %v75, 126
  %v79 = vpop.permute.xlu0 %78
  %80 = vrot.lane.b32.xlu0 %v72, 126
  %v81 = vpop.permute.xlu0 %80
  %vm82 = vcmask 1031168
  %v83 = vsel %vm82, %v77, %v79
  %v84 = vsel %vm82, %v79, %v81
  %88 = vst [vmem:[#allocation3 + $0x18] sm:$0xf] %v83
  %89 = vst [vmem:[#allocation3 + $0x20] sm:$0xf] %v84
  %90 = vst.msk [vmem:[#allocation3 + $0x28] sm:$0xf] %vm47, %v81
  %v91 = vld [vmem:[#allocation2] sm:$0xff]
  %v92 = vld [vmem:[#allocation2 + $0x8] sm:$0xf]
  %v95 = vcombine.low %v91, %v91
  %v96 = vcombine.low %v92, %v92
  %97 = vrot.lane.b32.xlu0 %v95, 125
  %v98 = vpop.permute.xlu0 %97
  %99 = vrot.lane.b32.xlu0 %v91, 125
  %v100 = vpop.permute.xlu0 %99
  %101 = vrot.lane.b32.xlu0 %v96, 125
  %v102 = vpop.permute.xlu0 %101
  %vm103 = vcmask 1022976
  %v104 = vsel %vm103, %v98, %v100
  %v105 = vsel %vm103, %v100, %v102
  %109 = vst [vmem:[#allocation3 + $0x18] sm:$0xf0] %v104
  %110 = vst [vmem:[#allocation3 + $0x20] sm:$0xf0] %v105
  %111 = vst.msk [vmem:[#allocation3 + $0x28] sm:$0xf0] %vm69, %v102
  %v112 = vld [vmem:[#allocation2] sm:$0xff]
  %v113 = vld [vmem:[#allocation2 + $0x8] sm:$0xf]
  %v116 = vcombine.high %v112, %v112
  %117 = vrot.lane.b32.xlu0 %v112, 124
  %v118 = vpop.permute.xlu0 %117
  %119 = vrot.lane.b32.xlu0 %v116, 124
  %v120 = vpop.permute.xlu0 %119
  %121 = vrot.lane.b32.xlu0 %v113, 124
  %v122 = vpop.permute.xlu0 %121
  %vm123 = vcmask 1014784
  %v124 = vsel %vm123, %v118, %v120
  %v125 = vsel %vm123, %v120, %v122
  %129 = vst [vmem:[#allocation3 + $0x30] sm:$0xf] %v124
  %130 = vst [vmem:[#allocation3 + $0x38] sm:$0xf] %v125
  %131 = vst.msk [vmem:[#allocation3 + $0x40] sm:$0xf] %vm47, %v122
  %v132 = vld [vmem:[#allocation2] sm:$0xff]
  %v133 = vld [vmem:[#allocation2 + $0x8] sm:$0xf]
  %v136 = vcombine.low %v132, %v132
  %v137 = vcombine.low %v133, %v133
  %138 = vrot.lane.b32.xlu0 %v136, 123
  %v139 = vpop.permute.xlu0 %138
  %140 = vrot.lane.b32.xlu0 %v132, 123
  %v141 = vpop.permute.xlu0 %140
  %142 = vrot.lane.b32.xlu0 %v137, 123
  %v143 = vpop.permute.xlu0 %142
  %vm144 = vcmask 1006592
  %v145 = vsel %vm144, %v139, %v141
  %v146 = vsel %vm144, %v141, %v143
  %150 = vst [vmem:[#allocation3 + $0x30] sm:$0xf0] %v145
  %151 = vst [vmem:[#allocation3 + $0x38] sm:$0xf0] %v146
  %152 = vst.msk [vmem:[#allocation3 + $0x40] sm:$0xf0] %vm69, %v143
  %v153 = vld [vmem:[#allocation2] sm:$0xff]
  %v154 = vld [vmem:[#allocation2 + $0x8] sm:$0xf]
  %v157 = vcombine.high %v153, %v153
  %158 = vrot.lane.b32.xlu0 %v153, 122
  %v159 = vpop.permute.xlu0 %158
  %160 = vrot.lane.b32.xlu0 %v157, 122
  %v161 = vpop.permute.xlu0 %160
  %162 = vrot.lane.b32.xlu0 %v154, 122
  %v163 = vpop.permute.xlu0 %162
  %vm164 = vcmask 998400
  %v165 = vsel %vm164, %v159, %v161
  %v166 = vsel %vm164, %v161, %v163
  %170 = vst [vmem:[#allocation3 + $0x48] sm:$0xf] %v165
  %171 = vst [vmem:[#allocation3 + $0x50] sm:$0xf] %v166
  %172 = vst.msk [vmem:[#allocation3 + $0x58] sm:$0xf] %vm47, %v163
  %v173 = vld [vmem:[#allocation2] sm:$0xff]
  %v174 = vld [vmem:[#allocation2 + $0x8] sm:$0xf]
  %v177 = vcombine.low %v173, %v173
  %v178 = vcombine.low %v174, %v174
  %179 = vrot.lane.b32.xlu0 %v177, 121
  %v180 = vpop.permute.xlu0 %179
  %181 = vrot.lane.b32.xlu0 %v173, 121
  %v182 = vpop.permute.xlu0 %181
  %183 = vrot.lane.b32.xlu0 %v178, 121
  %v184 = vpop.permute.xlu0 %183
  %vm185 = vcmask 990208
  %v186 = vsel %vm185, %v180, %v182
  %v187 = vsel %vm185, %v182, %v184
  %191 = vst [vmem:[#allocation3 + $0x48] sm:$0xf0] %v186
  %192 = vst [vmem:[#allocation3 + $0x50] sm:$0xf0] %v187
  %193 = vst.msk [vmem:[#allocation3 + $0x58] sm:$0xf0] %vm69, %v184
  %v194 = vld [vmem:[#allocation2] sm:$0xff]
  %v195 = vld [vmem:[#allocation2 + $0x8] sm:$0xf]
  %v198 = vcombine.high %v194, %v194
  %199 = vrot.lane.b32.xlu0 %v194, 120
  %v200 = vpop.permute.xlu0 %199
  %201 = vrot.lane.b32.xlu0 %v198, 120
  %v202 = vpop.permute.xlu0 %201
  %203 = vrot.lane.b32.xlu0 %v195, 120
  %v204 = vpop.permute.xlu0 %203
  %vm205 = vcmask 982016
  %v206 = vsel %vm205, %v200, %v202
  %v207 = vsel %vm205, %v202, %v204
  %211 = vst [vmem:[#allocation3 + $0x60] sm:$0xf] %v206
  %212 = vst [vmem:[#allocation3 + $0x68] sm:$0xf] %v207
  %213 = vst.msk [vmem:[#allocation3 + $0x70] sm:$0xf] %vm47, %v204
  %v214 = vld [vmem:[#allocation2] sm:$0xff]
  %v215 = vld [vmem:[#allocation2 + $0x8] sm:$0xf]
  %v218 = vcombine.low %v214, %v214
  %v219 = vcombine.low %v215, %v215
  %220 = vrot.lane.b32.xlu0 %v218, 119
  %v221 = vpop.permute.xlu0 %220
  %222 = vrot.lane.b32.xlu0 %v214, 119
  %v223 = vpop.permute.xlu0 %222
  %224 = vrot.lane.b32.xlu0 %v219, 119
  %v225 = vpop.permute.xlu0 %224
  %vm226 = vcmask 973824
  %v227 = vsel %vm226, %v221, %v223
  %v228 = vsel %vm226, %v223, %v225
  %232 = vst [vmem:[#allocation3 + $0x60] sm:$0xf0] %v227
  %233 = vst [vmem:[#allocation3 + $0x68] sm:$0xf0] %v228
  %234 = vst.msk [vmem:[#allocation3 + $0x70] sm:$0xf0] %vm69, %v225
  %v235 = vld [vmem:[#allocation2] sm:$0xff]
  %v236 = vld [vmem:[#allocation2 + $0x8] sm:$0xf]
  %v239 = vcombine.high %v235, %v235
  %240 = vrot.lane.b32.xlu0 %v235, 118
  %v241 = vpop.permute.xlu0 %240
  %242 = vrot.lane.b32.xlu0 %v239, 118
  %v243 = vpop.permute.xlu0 %242
  %244 = vrot.lane.b32.xlu0 %v236, 118
  %v245 = vpop.permute.xlu0 %244
  %vm246 = vcmask 965632
  %v247 = vsel %vm246, %v241, %v243
  %v248 = vsel %vm246, %v243, %v245
  %252 = vst [vmem:[#allocation3 + $0x78] sm:$0xf] %v247
  %253 = vst [vmem:[#allocation3 + $0x80] sm:$0xf] %v248
  %254 = vst.msk [vmem:[#allocation3 + $0x88] sm:$0xf] %vm47, %v245
  %v255 = vld [vmem:[#allocation2] sm:$0xff]
  %v256 = vld [vmem:[#allocation2 + $0x8] sm:$0xf]
  %v259 = vcombine.low %v255, %v255
  %v260 = vcombine.low %v256, %v256
  %261 = vrot.lane.b32.xlu0 %v259, 117
  %v262 = vpop.permute.xlu0 %261
  %263 = vrot.lane.b32.xlu0 %v255, 117
  %v264 = vpop.permute.xlu0 %263
  %265 = vrot.lane.b32.xlu0 %v260, 117
  %v266 = vpop.permute.xlu0 %265
  %vm267 = vcmask 957440
  %v268 = vsel %vm267, %v262, %v264
  %v269 = vsel %vm267, %v264, %v266
  %273 = vst [vmem:[#allocation3 + $0x78] sm:$0xf0] %v268
  %274 = vst [vmem:[#allocation3 + $0x80] sm:$0xf0] %v269
  %275 = vst.msk [vmem:[#allocation3 + $0x88] sm:$0xf0] %vm69, %v266
  %v276 = vld [vmem:[#allocation2] sm:$0xff]
  %v277 = vld [vmem:[#allocation2 + $0x8] sm:$0xf]
  %v280 = vcombine.high %v276, %v276
  %281 = vrot.lane.b32.xlu0 %v276, 116
  %v282 = vpop.permute.xlu0 %281
  %283 = vrot.lane.b32.xlu0 %v280, 116
  %v284 = vpop.permute.xlu0 %283
  %285 = vrot.lane.b32.xlu0 %v277, 116
  %v286 = vpop.permute.xlu0 %285
  %vm287 = vcmask 949248
  %v288 = vsel %vm287, %v282, %v284
  %v289 = vsel %vm287, %v284, %v286
  %293 = vst [vmem:[#allocation3 + $0x90] sm:$0xf] %v288
  %294 = vst [vmem:[#allocation3 + $0x98] sm:$0xf] %v289
  %295 = vst.msk [vmem:[#allocation3 + $0xa0] sm:$0xf] %vm47, %v286
  %v296 = vld [vmem:[#allocation2] sm:$0xff]
  %v297 = vld [vmem:[#allocation2 + $0x8] sm:$0xf]
  %v300 = vcombine.low %v296, %v296
  %v301 = vcombine.low %v297, %v297
  %302 = vrot.lane.b32.xlu0 %v300, 115
  %v303 = vpop.permute.xlu0 %302
  %304 = vrot.lane.b32.xlu0 %v296, 115
  %v305 = vpop.permute.xlu0 %304
  %306 = vrot.lane.b32.xlu0 %v301, 115
  %v307 = vpop.permute.xlu0 %306
  %vm308 = vcmask 941056
  %v309 = vsel %vm308, %v303, %v305
  %v310 = vsel %vm308, %v305, %v307
  %314 = vst [vmem:[#allocation3 + $0x90] sm:$0xf0] %v309
  %315 = vst [vmem:[#allocation3 + $0x98] sm:$0xf0] %v310
  %316 = vst.msk [vmem:[#allocation3 + $0xa0] sm:$0xf0] %vm69, %v307
  %v317 = vld [vmem:[#allocation2] sm:$0xff]
  %v318 = vld [vmem:[#allocation2 + $0x8] sm:$0xf]
  %v321 = vcombine.high %v317, %v317
  %322 = vrot.lane.b32.xlu0 %v317, 114
  %v323 = vpop.permute.xlu0 %322
  %324 = vrot.lane.b32.xlu0 %v321, 114
  %v325 = vpop.permute.xlu0 %324
  %326 = vrot.lane.b32.xlu0 %v318, 114
  %v327 = vpop.permute.xlu0 %326
  %vm328 = vcmask 932864
  %v329 = vsel %vm328, %v323, %v325
  %v330 = vsel %vm328, %v325, %v327
  %334 = vst [vmem:[#allocation3 + $0xa8] sm:$0xf] %v329
  %335 = vst [vmem:[#allocation3 + $0xb0] sm:$0xf] %v330
  %336 = vst.msk [vmem:[#allocation3 + $0xb8] sm:$0xf] %vm47, %v327
  %v337 = vld [vmem:[#allocation2] sm:$0xff]
  %v338 = vld [vmem:[#allocation2 + $0x8] sm:$0xf]
  %v341 = vcombine.low %v337, %v337
  %v342 = vcombine.low %v338, %v338
  %343 = vrot.lane.b32.xlu0 %v341, 113
  %v344 = vpop.permute.xlu0 %343
  %345 = vrot.lane.b32.xlu0 %v337, 113
  %v346 = vpop.permute.xlu0 %345
  %347 = vrot.lane.b32.xlu0 %v342, 113
  %v348 = vpop.permute.xlu0 %347
  %vm349 = vcmask 924672
  %v350 = vsel %vm349, %v344, %v346
  %v351 = vsel %vm349, %v346, %v348
  %355 = vst [vmem:[#allocation3 + $0xa8] sm:$0xf0] %v350
  %356 = vst [vmem:[#allocation3 + $0xb0] sm:$0xf0] %v351
  %357 = vst.msk [vmem:[#allocation3 + $0xb8] sm:$0xf0] %vm69, %v348
  %v358 = vld [vmem:[%s1] sm:$0xff]
  %v359 = vld [vmem:[%s1 + $0x8] sm:$0xf]
  %v360 = vld [vmem:[#allocation3] sm:$0xff]
  %v361 = vld [vmem:[#allocation3 + $0x8] sm:$0xff]
  %v362 = vld [vmem:[#allocation3 + $0x10] sm:$0xff]
  %v363 = vld [vmem:[#allocation3 + $0x18] sm:$0xff]
  %v364 = vld [vmem:[#allocation3 + $0x20] sm:$0xff]
  %v365 = vld [vmem:[#allocation3 + $0x28] sm:$0xff]
  %v366 = vld [vmem:[#allocation3 + $0x30] sm:$0xff]
  %v367 = vld [vmem:[#allocation3 + $0x38] sm:$0xff]
  %v368 = vld [vmem:[#allocation3 + $0x40] sm:$0xff]
  %v369 = vld [vmem:[#allocation3 + $0x48] sm:$0xff]
  %v370 = vld [vmem:[#allocation3 + $0x50] sm:$0xff]
  %v371 = vld [vmem:[#allocation3 + $0x58] sm:$0xff]
  %v372 = vld [vmem:[#allocation3 + $0x60] sm:$0xff]
  %v373 = vld [vmem:[#allocation3 + $0x68] sm:$0xff]
  %v374 = vld [vmem:[#allocation3 + $0x70] sm:$0xff]
  %v375 = vld [vmem:[#allocation3 + $0x78] sm:$0xff]
  %v376 = vld [vmem:[#allocation3 + $0x80] sm:$0xff]
  %v377 = vld [vmem:[#allocation3 + $0x88] sm:$0xff]
  %v378 = vld [vmem:[#allocation3 + $0x90] sm:$0xff]
  %v379 = vld [vmem:[#allocation3 + $0x98] sm:$0xff]
  %v380 = vld [vmem:[#allocation3 + $0xa0] sm:$0xff]
  %v381 = vld [vmem:[#allocation3 + $0xa8] sm:$0xff]
  %v382 = vld [vmem:[#allocation3 + $0xb0] sm:$0xff]
  %v383 = vld [vmem:[#allocation3 + $0xb8] sm:$0xff]
  %vm384 = vcmask 523264
  %v386 = vsel %vm384, %v358, 0
  %v389 = vsel %vm384, %v359, 0
  %391 = vmatprep.subr.mxu0 %v361
  %392 = vmatpush1.msra.mxu0 %v360
  %393 = vmatprep.subr.mxu0 %v364
  %394 = vmatpush1.msra.mxu0 %v363
  %395 = vmatprep.subr.mxu0 %v367
  %396 = vmatpush1.msra.mxu0 %v366
  %397 = vmatprep.subr.mxu0 %v370
  %398 = vmatpush1.msra.mxu0 %v369
  %399 = vmatprep.subr.mxu0 %v373
  %400 = vmatpush1.msra.mxu0 %v372
  %401 = vmatprep.subr.mxu0 %v376
  %402 = vmatpush1.msra.mxu0 %v375
  %403 = vmatprep.subr.mxu0 %v379
  %404 = vmatpush1.msra.mxu0 %v378
  %405 = vmatprep.subr.mxu0 %v382
  %406 = vmatpush1.msra.mxu0 %v381
  %407 = vmatprep.subr.mxu0 0.0
  %408 = vmatpush1.msra.mxu0 0.0
  %409 = vmatprep.subr.mxu0 0.0
  %410 = vmatpush1.msra.mxu0 0.0
  %411 = vmatprep.subr.mxu0 0.0
  %412 = vmatpush1.msra.mxu0 0.0
  %413 = vmatprep.subr.mxu0 0.0
  %414 = vmatpush1.msra.mxu0 0.0
  %415 = vmatprep.subr.mxu0 0.0
  %416 = vmatpush1.msra.mxu0 0.0
  %417 = vmatprep.subr.mxu0 0.0
  %418 = vmatpush1.msra.mxu0 0.0
  %419 = vmatprep.subr.mxu0 0.0
  %420 = vmatpush1.msra.mxu0 0.0
  %421 = vmatprep.subr.mxu0 0.0
  %422 = vmatpush1.msra.mxu0 0.0
  %423 = vmatprep.subr.mxu0 0.0
  %424 = vmatpush1.msra.mxu0 0.0
  %425 = vmatprep.subr.mxu0 0.0
  %426 = vmatpush1.msra.mxu0 0.0
  %427 = vmatprep.subr.mxu0 0.0
  %428 = vmatpush1.msra.mxu0 0.0
  %429 = vmatprep.subr.mxu0 0.0
  %430 = vmatpush1.msra.mxu0 0.0
  %431 = vmatprep.subr.mxu0 0.0
  %432 = vmatpush1.msra.mxu0 0.0
  %433 = vmatprep.subr.mxu0 0.0
  %434 = vmatpush1.msra.mxu0 0.0
  %435 = vmatprep.subr.mxu0 0.0
  %436 = vmatpush1.msra.mxu0 0.0
  %437 = vmatprep.subr.mxu0 0.0
  %438 = vmatpush1.msra.mxu0 0.0
  %439 = vmatprep.subr.mxu0 0.0
  %440 = vmatpush1.msra.mxu0 0.0
  %441 = vmatprep.subr.mxu0 0.0
  %442 = vmatpush1.msra.mxu0 0.0
  %443 = vmatprep.subr.mxu0 0.0
  %444 = vmatpush1.msra.mxu0 0.0
  %445 = vmatprep.subr.mxu0 0.0
  %446 = vmatpush1.msra.mxu0 0.0
  %447 = vmatprep.subr.mxu0 0.0
  %448 = vmatpush1.msra.mxu0 0.0
  %449 = vmatprep.subr.mxu0 0.0
  %450 = vmatpush1.msra.mxu0 0.0
  %451 = vmatprep.subr.mxu0 0.0
  %452 = vmatpush1.msra.mxu0 0.0
  %453 = vmatprep.subr.mxu0 0.0
  %454 = vmatpush1.msra.mxu0 0.0
  %455 = vmatprep.mubr.f32.mxu0 0.0
  %456 = vmatmul.mubr.f32.gmra.mrb[0].mxu0 %v386
  %v457 = vpop.f32.mrb[0].mxu0
  %v458 = vadd.f32 0.0, %v457
  %v459 = vpop.f32.mrb[0].mxu0
  %v460 = vadd.f32 0.0, %v459
  %461 = vmatprep.mubr.f32.mxu0 0.0
  %462 = vmatmul.mubr.f32.gmra.mrb[0].mxu0 %v389
  %v463 = vpop.f32.mrb[0].mxu0
  %v464 = vadd.f32 0.0, %v463
  %v465 = vpop.f32.mrb[0].mxu0
  %v466 = vadd.f32 0.0, %v465
  %467 = vdwg.mxu0
  %468 = vmatprep.subr.mxu0 0.0
  %469 = vmatpush1.msra.mxu0 %v362
  %470 = vmatprep.subr.mxu0 0.0
  %471 = vmatpush1.msra.mxu0 %v365
  %472 = vmatprep.subr.mxu0 0.0
  %473 = vmatpush1.msra.mxu0 %v368
  %474 = vmatprep.subr.mxu0 0.0
  %475 = vmatpush1.msra.mxu0 %v371
  %476 = vmatprep.subr.mxu0 0.0
  %477 = vmatpush1.msra.mxu0 %v374
  %478 = vmatprep.subr.mxu0 0.0
  %479 = vmatpush1.msra.mxu0 %v377
  %480 = vmatprep.subr.mxu0 0.0
  %481 = vmatpush1.msra.mxu0 %v380
  %482 = vmatprep.subr.mxu0 0.0
  %483 = vmatpush1.msra.mxu0 %v383
  %484 = vmatprep.subr.mxu0 0.0
  %485 = vmatpush1.msra.mxu0 0.0
  %486 = vmatprep.subr.mxu0 0.0
  %487 = vmatpush1.msra.mxu0 0.0
  %488 = vmatprep.subr.mxu0 0.0
  %489 = vmatpush1.msra.mxu0 0.0
  %490 = vmatprep.subr.mxu0 0.0
  %491 = vmatpush1.msra.mxu0 0.0
  %492 = vmatprep.subr.mxu0 0.0
  %493 = vmatpush1.msra.mxu0 0.0
  %494 = vmatprep.subr.mxu0 0.0
  %495 = vmatpush1.msra.mxu0 0.0
  %496 = vmatprep.subr.mxu0 0.0
  %497 = vmatpush1.msra.mxu0 0.0
  %498 = vmatprep.subr.mxu0 0.0
  %499 = vmatpush1.msra.mxu0 0.0
  %500 = vmatprep.subr.mxu0 0.0
  %501 = vmatpush1.msra.mxu0 0.0
  %502 = vmatprep.subr.mxu0 0.0
  %503 = vmatpush1.msra.mxu0 0.0
  %504 = vmatprep.subr.mxu0 0.0
  %505 = vmatpush1.msra.mxu0 0.0
  %506 = vmatprep.subr.mxu0 0.0
  %507 = vmatpush1.msra.mxu0 0.0
  %508 = vmatprep.subr.mxu0 0.0
  %509 = vmatpush1.msra.mxu0 0.0
  %510 = vmatprep.subr.mxu0 0.0
  %511 = vmatpush1.msra.mxu0 0.0
  %512 = vmatprep.subr.mxu0 0.0
  %513 = vmatpush1.msra.mxu0 0.0
  %514 = vmatprep.subr.mxu0 0.0
  %515 = vmatpush1.msra.mxu0 0.0
  %516 = vmatprep.subr.mxu0 0.0
  %517 = vmatpush1.msra.mxu0 0.0
  %518 = vmatprep.subr.mxu0 0.0
  %519 = vmatpush1.msra.mxu0 0.0
  %520 = vmatprep.subr.mxu0 0.0
  %521 = vmatpush1.msra.mxu0 0.0
  %522 = vmatprep.subr.mxu0 0.0
  %523 = vmatpush1.msra.mxu0 0.0
  %524 = vmatprep.subr.mxu0 0.0
  %525 = vmatpush1.msra.mxu0 0.0
  %526 = vmatprep.subr.mxu0 0.0
  %527 = vmatpush1.msra.mxu0 0.0
  %528 = vmatprep.subr.mxu0 0.0
  %529 = vmatpush1.msra.mxu0 0.0
  %530 = vmatprep.subr.mxu0 0.0
  %531 = vmatpush1.msra.mxu0 0.0
  %532 = vmatprep.mubr.f32.mxu0 0.0
  %533 = vmatmul.mubr.f32.gmra.mrb[0].mxu0 %v386
  %v534 = vpop.f32.mrb[0].mxu0
  %v535 = vadd.f32 0.0, %v534
  %v536 = vpop.f32.mrb[0].mxu0
  %537 = vmatprep.mubr.f32.mxu0 0.0
  %538 = vmatmul.mubr.f32.gmra.mrb[0].mxu0 %v389
  %v539 = vpop.f32.mrb[0].mxu0
  %v540 = vadd.f32 0.0, %v539
  %v541 = vpop.f32.mrb[0].mxu0
  %542 = vdwg.mxu0
  %549 = vrot.lane.b32.xlu0 %v458, 127
  %v550 = vpop.permute.xlu0 %549
  %551 = vrot.lane.b32.xlu0 %v460, 127
  %v552 = vpop.permute.xlu0 %551
  %553 = vrot.lane.b32.xlu0 %v535, 127
  %v554 = vpop.permute.xlu0 %553
  %555 = vrot.lane.b32.xlu0 %v464, 127
  %v556 = vpop.permute.xlu0 %555
  %557 = vrot.lane.b32.xlu0 %v466, 127
  %v558 = vpop.permute.xlu0 %557
  %559 = vrot.lane.b32.xlu0 %v540, 127
  %v560 = vpop.permute.xlu0 %559
  %v561 = vsel %vm61, %v550, %v552
  %v562 = vsel %vm61, %v552, %v554
  %v563 = vsel %vm61, %v556, %v558
  %v564 = vsel %vm61, %v558, %v560
  %v569 = vmax.f32 %v458, %v561
  %v570 = vmax.f32 %v460, %v562
  %v571 = vmax.f32 %v464, %v563
  %v572 = vmax.f32 %v466, %v564
  %v573 = vld [vmem:[%s3] sm:$0xff]
  %v574 = vld [vmem:[%s3 + $0x8] sm:$0xff]
  %v575 = vld [vmem:[%s3 + $0x10] sm:$0xff]
  %v576 = vld [vmem:[%s3 + $0x18] sm:$0xff]
  %v577 = vld [vmem:[%s3 + $0x20] sm:$0xff]
  %v578 = vld [vmem:[%s3 + $0x28] sm:$0xff]
  %v579 = vld [vmem:[%s3 + $0x30] sm:$0xff]
  %v580 = vld [vmem:[%s3 + $0x38] sm:$0xff]
  %v581 = vld [vmem:[%s3 + $0x40] sm:$0xff]
  %v582 = vld [vmem:[%s3 + $0x48] sm:$0xff]
  %v583 = vld [vmem:[%s3 + $0x50] sm:$0xff]
  %v584 = vld [vmem:[%s3 + $0x58] sm:$0xff]
  %v585 = vld [vmem:[%s3 + $0x60] sm:$0xff]
  %v586 = vld [vmem:[%s3 + $0x68] sm:$0xff]
  %v587 = vld [vmem:[%s3 + $0x70] sm:$0xff]
  %v588 = vld [vmem:[%s3 + $0x78] sm:$0xff]
  %589 = vmatprep.subr.mxu0 0.0
  %590 = vmatpush1.msra.mxu0 %v573
  %591 = vmatprep.subr.mxu0 0.0
  %592 = vmatpush1.msra.mxu0 %v574
  %593 = vmatprep.subr.mxu0 0.0
  %594 = vmatpush1.msra.mxu0 %v575
  %595 = vmatprep.subr.mxu0 0.0
  %596 = vmatpush1.msra.mxu0 %v576
  %597 = vmatprep.subr.mxu0 0.0
  %598 = vmatpush1.msra.mxu0 %v577
  %599 = vmatprep.subr.mxu0 0.0
  %600 = vmatpush1.msra.mxu0 %v578
  %601 = vmatprep.subr.mxu0 0.0
  %602 = vmatpush1.msra.mxu0 %v579
  %603 = vmatprep.subr.mxu0 0.0
  %604 = vmatpush1.msra.mxu0 %v580
  %605 = vmatprep.subr.mxu0 0.0
  %606 = vmatpush1.msra.mxu0 %v581
  %607 = vmatprep.subr.mxu0 0.0
  %608 = vmatpush1.msra.mxu0 %v582
  %609 = vmatprep.subr.mxu0 0.0
  %610 = vmatpush1.msra.mxu0 %v583
  %611 = vmatprep.subr.mxu0 0.0
  %612 = vmatpush1.msra.mxu0 %v584
  %613 = vmatprep.subr.mxu0 0.0
  %614 = vmatpush1.msra.mxu0 %v585
  %615 = vmatprep.subr.mxu0 0.0
  %616 = vmatpush1.msra.mxu0 %v586
  %617 = vmatprep.subr.mxu0 0.0
  %618 = vmatpush1.msra.mxu0 %v587
  %619 = vmatprep.subr.mxu0 0.0
  %620 = vmatpush1.msra.mxu0 %v588
  %621 = vmatprep.subr.mxu0 0.0
  %622 = vmatpush1.msra.mxu0 0.0
  %623 = vmatprep.subr.mxu0 0.0
  %624 = vmatpush1.msra.mxu0 0.0
  %625 = vmatprep.subr.mxu0 0.0
  %626 = vmatpush1.msra.mxu0 0.0
  %627 = vmatprep.subr.mxu0 0.0
  %628 = vmatpush1.msra.mxu0 0.0
  %629 = vmatprep.subr.mxu0 0.0
  %630 = vmatpush1.msra.mxu0 0.0
  %631 = vmatprep.subr.mxu0 0.0
  %632 = vmatpush1.msra.mxu0 0.0
  %633 = vmatprep.subr.mxu0 0.0
  %634 = vmatpush1.msra.mxu0 0.0
  %635 = vmatprep.subr.mxu0 0.0
  %636 = vmatpush1.msra.mxu0 0.0
  %637 = vmatprep.subr.mxu0 0.0
  %638 = vmatpush1.msra.mxu0 0.0
  %639 = vmatprep.subr.mxu0 0.0
  %640 = vmatpush1.msra.mxu0 0.0
  %641 = vmatprep.subr.mxu0 0.0
  %642 = vmatpush1.msra.mxu0 0.0
  %643 = vmatprep.subr.mxu0 0.0
  %644 = vmatpush1.msra.mxu0 0.0
  %645 = vmatprep.subr.mxu0 0.0
  %646 = vmatpush1.msra.mxu0 0.0
  %647 = vmatprep.subr.mxu0 0.0
  %648 = vmatpush1.msra.mxu0 0.0
  %649 = vmatprep.subr.mxu0 0.0
  %650 = vmatpush1.msra.mxu0 0.0
  %651 = vmatprep.subr.mxu0 0.0
  %652 = vmatpush1.msra.mxu0 0.0
  %653 = vmatprep.mubr.f32.mxu0 0.0
  %654 = vmatmul.mubr.f32.gmra.mrb[0].mxu0 %v569
  %v655 = vpop.f32.mrb[0].mxu0
  %v656 = vadd.f32 0.0, %v655
  %v657 = vpop.f32.mrb[0].mxu0
  %658 = vmatprep.mubr.f32.mxu0 0.0
  %659 = vmatmul.mubr.f32.gmra.mrb[0].mxu0 %v571
  %v660 = vpop.f32.mrb[0].mxu0
  %v661 = vadd.f32 0.0, %v660
  %v662 = vpop.f32.mrb[0].mxu0
  %663 = vdwg.mxu0
  %664 = vmatprep.subr.mxu0 0.0
  %665 = vmatpush1.msra.mxu0 %v573
  %666 = vmatprep.subr.mxu0 0.0
  %667 = vmatpush1.msra.mxu0 %v574
  %668 = vmatprep.subr.mxu0 0.0
  %669 = vmatpush1.msra.mxu0 %v575
  %670 = vmatprep.subr.mxu0 0.0
  %671 = vmatpush1.msra.mxu0 %v576
  %672 = vmatprep.subr.mxu0 0.0
  %673 = vmatpush1.msra.mxu0 %v577
  %674 = vmatprep.subr.mxu0 0.0
  %675 = vmatpush1.msra.mxu0 %v578
  %676 = vmatprep.subr.mxu0 0.0
  %677 = vmatpush1.msra.mxu0 %v579
  %678 = vmatprep.subr.mxu0 0.0
  %679 = vmatpush1.msra.mxu0 %v580
  %680 = vmatprep.subr.mxu0 0.0
  %681 = vmatpush1.msra.mxu0 %v581
  %682 = vmatprep.subr.mxu0 0.0
  %683 = vmatpush1.msra.mxu0 %v582
  %684 = vmatprep.subr.mxu0 0.0
  %685 = vmatpush1.msra.mxu0 %v583
  %686 = vmatprep.subr.mxu0 0.0
  %687 = vmatpush1.msra.mxu0 %v584
  %688 = vmatprep.subr.mxu0 0.0
  %689 = vmatpush1.msra.mxu0 %v585
  %690 = vmatprep.subr.mxu0 0.0
  %691 = vmatpush1.msra.mxu0 %v586
  %692 = vmatprep.subr.mxu0 0.0
  %693 = vmatpush1.msra.mxu0 %v587
  %694 = vmatprep.subr.mxu0 0.0
  %695 = vmatpush1.msra.mxu0 %v588
  %696 = vmatprep.subr.mxu0 0.0
  %697 = vmatpush1.msra.mxu0 0.0
  %698 = vmatprep.subr.mxu0 0.0
  %699 = vmatpush1.msra.mxu0 0.0
  %700 = vmatprep.subr.mxu0 0.0
  %701 = vmatpush1.msra.mxu0 0.0
  %702 = vmatprep.subr.mxu0 0.0
  %703 = vmatpush1.msra.mxu0 0.0
  %704 = vmatprep.subr.mxu0 0.0
  %705 = vmatpush1.msra.mxu0 0.0
  %706 = vmatprep.subr.mxu0 0.0
  %707 = vmatpush1.msra.mxu0 0.0
  %708 = vmatprep.subr.mxu0 0.0
  %709 = vmatpush1.msra.mxu0 0.0
  %710 = vmatprep.subr.mxu0 0.0
  %711 = vmatpush1.msra.mxu0 0.0
  %712 = vmatprep.subr.mxu0 0.0
  %713 = vmatpush1.msra.mxu0 0.0
  %714 = vmatprep.subr.mxu0 0.0
  %715 = vmatpush1.msra.mxu0 0.0
  %716 = vmatprep.subr.mxu0 0.0
  %717 = vmatpush1.msra.mxu0 0.0
  %718 = vmatprep.subr.mxu0 0.0
  %719 = vmatpush1.msra.mxu0 0.0
  %720 = vmatprep.subr.mxu0 0.0
  %721 = vmatpush1.msra.mxu0 0.0
  %722 = vmatprep.subr.mxu0 0.0
  %723 = vmatpush1.msra.mxu0 0.0
  %724 = vmatprep.subr.mxu0 0.0
  %725 = vmatpush1.msra.mxu0 0.0
  %726 = vmatprep.subr.mxu0 0.0
  %727 = vmatpush1.msra.mxu0 0.0
  %728 = vmatprep.mubr.f32.mxu0 0.0
  %729 = vmatmul.mubr.f32.gmra.mrb[0].mxu0 %v570
  %v730 = vpop.f32.mrb[0].mxu0
  %v731 = vadd.f32 0.0, %v730
  %v732 = vpop.f32.mrb[0].mxu0
  %733 = vmatprep.mubr.f32.mxu0 0.0
  %734 = vmatmul.mubr.f32.gmra.mrb[0].mxu0 %v572
  %v735 = vpop.f32.mrb[0].mxu0
  %v736 = vadd.f32 0.0, %v735
  %v737 = vpop.f32.mrb[0].mxu0
  %738 = vdwg.mxu0
  %741 = vrot.lane.b32.xlu0 %v731, 8
  %v742 = vpop.permute.xlu0 %741
  %743 = vrot.lane.b32.xlu0 %v736, 8
  %v744 = vpop.permute.xlu0 %743
  %vm747 = vcmask 64512
  %v748 = vsel %vm747, %v656, %v742
  %v749 = vsel %vm747, %v661, %v744
  %v750 = vld [vmem:[%s2] sm:$0xff]
  %v751 = vld [vmem:[%s2 + $0x8] sm:$0xf]
  %753 = vset.pattern.permute.xlu0 0
  %754 = vperm.xlu0 %753, %v750
  %v755 = vpop.permute.xlu0 %754
  %758 = vset.pattern.permute.xlu0 0
  %759 = vperm.xlu0 %758, %v751
  %v760 = vpop.permute.xlu0 %759
  %v762 = vadd.f32 %v748, %v755
  %v763 = vadd.f32 %v749, %v760
  %vm764 = vcmask 130048
  %765 = vst.msk [vmem:[%s4] sm:$0xff] %vm764, %v762
  %vm766 = vcmask 125952
  %767 = vst.msk [vmem:[%s4 + $0x8] sm:$0xf] %vm766, %v763
  // Predicated region
  $region18: #{tpu_custom_call.1} parent=0 // pred_check
    _
  $region19: #{tpu_custom_call.1} parent=0 // pred_check_branch
    %769 = sbr.rel (0) target = $region21
  $region20: #{tpu_custom_call.1} parent=0 // pred_region
    _
  $region21: #{tpu_custom_call.1} parent=0 // pred_fallthru
    _
  // Predicated region
  $region22: #{tpu_custom_call.1} parent=0 // pred_check
    _
  $region23: #{tpu_custom_call.1} parent=0 // pred_check_branch
    %771 = sbr.rel (0) target = $region25
  $region24: #{tpu_custom_call.1} parent=0 // pred_region
    _
  $region25: #{tpu_custom_call.1} parent=0 // pred_fallthru
    _

</llo_original>
